<compile_context>
chip_gen: v7x
topology: tpu7x:2x2x1
jax: 0.10.0
libtpu: 0.0.40
codegen_flags: <defaults>
</compile_context>

<pallas_src>
import functools

import jax
import jax.numpy as jnp
from jax.experimental import pallas as pl
from jax.experimental.pallas import tpu as pltpu


def _round_up(x: int, m: int) -> int:
    return ((x + m - 1) // m) * m


# ---- VMEM budgets (conservative: legal on v5e/v6e/v7x alike) ----------------
_W_VMEM_BUDGET = 16 * 1024 * 1024    # double-buffered W tile (bf16)
_ROW_VMEM_BUDGET = 16 * 1024 * 1024  # double-buffered x tile + f32 out tile + temps
_VMEM_LIMIT = 48 * 1024 * 1024       # scoped limit handed to Mosaic


def _choose_f_tile(F: int, K_pad: int):
    """Reduction (feature) tile. Prefer a fully-resident W (single k step)."""
    F_pad = _round_up(F, 128)
    if 2 * F_pad * K_pad * 2 <= _W_VMEM_BUDGET:      # 2 buffers * bf16
        return F_pad, F_pad                          # W resident -> no k axis
    tf = (_W_VMEM_BUDGET // (2 * K_pad * 2)) // 128 * 128
    tf = max(128, tf)
    return tf, _round_up(F, tf)


def _choose_batch_tiles(B: int, tf: int, K_pad: int, w_resident: bool):
    """Batch tile: as large as VMEM allows, minimal padding (B_pad - B < 8*n),
    and >=2 tiles when that is free (v7x dual-TensorCore sharding)."""
    # bytes/row: x double-buffer (bf16) + out double-buffer (f32) + epilogue temps
    per_row = 2 * tf * 2 + 2 * K_pad * 4 + 3 * K_pad * 4
    cap = max(8, min(512, (_ROW_VMEM_BUDGET // per_row) // 8 * 8))
    B8 = _round_up(B, 8)
    n = -(-B8 // cap)
    # With W resident its block index is constant, so extra batch tiles do not
    # re-stream W; splitting lets both v7x TensorCores work on the batch axis.
    if n == 1 and w_resident and B >= 32:
        n = 2
    tb = _round_up(-(-B8 // n), 8)
    return tb, n * tb


# ---- kernels ----------------------------------------------------------------
def _fused_kernel(x_ref, w_ref, b_ref, o_ref):
    # Single reduction step: W tile fully resident along F.
    # x_ref: [TB, F_pad] bf16   w_ref: [F_pad, Kp] bf16   b_ref: [1, Kp] f32
    logits = jnp.dot(x_ref[...], w_ref[...], preferred_element_type=jnp.float32)
    logits = logits + b_ref[...]
    m = jnp.max(logits, axis=1, keepdims=True)
    e = jnp.exp(logits - m)
    # Exact normalization (once per batch tile): row sums == 1 to f32 precision.
    o_ref[...] = (e / jnp.sum(e, axis=1, keepdims=True)).astype(o_ref.dtype)


def _tiled_kernel(x_ref, w_ref, b_ref, o_ref):
    # F does not fit VMEM: accumulate directly into the resident f32 output
    # block (out index_map ignores k), no separate scratch accumulator.
    k = pl.program_id(1)

    @pl.when(k == 0)
    def _():
        o_ref[...] = jnp.zeros_like(o_ref)

    o_ref[...] += jnp.dot(
        x_ref[...], w_ref[...], preferred_element_type=jnp.float32
    )

    @pl.when(k == pl.num_programs(1) - 1)
    def _():
        logits = o_ref[...] + b_ref[...]
        m = jnp.max(logits, axis=1, keepdims=True)
        e = jnp.exp(logits - m)
        o_ref[...] = (e / jnp.sum(e, axis=1, keepdims=True)).astype(o_ref.dtype)


# ---- wrappers ---------------------------------------------------------------
def prepare_classifier_params(w, b):
    """Pad + cast the static head parameters ONCE (at model-load time) so the
    per-call path never re-pads / re-casts the W-sized array in HBM."""
    F, K = w.shape
    K_pad = _round_up(K, 128)                   # lane-dense class axis
    _, F_pad = _choose_f_tile(F, K_pad)
    w_p = jnp.pad(w, ((0, F_pad - F), (0, K_pad - K))).astype(jnp.bfloat16)
    # Padded classes get -inf bias -> exp() == 0 -> row sums stay exact.
    b_p = jnp.pad(
        b.astype(jnp.float32), (0, K_pad - K), constant_values=float("-inf")
    ).reshape(1, K_pad)
    return w_p, b_p


@functools.partial(jax.jit, static_argnames=("num_classes",))
def classifier_forward(x_nchw, w_p, b_p, *, num_classes):
    """x_nchw: [B, C, H, W] f32; (w_p, b_p) from prepare_classifier_params.
    Returns [B, num_classes] probabilities == Softmax(dim=1)(flatten(x) @ W + b)."""
    B = x_nchw.shape[0]
    F = 1
    for d in x_nchw.shape[1:]:
        F *= d
    F_pad, K_pad = w_p.shape

    tf, f_pad_check = _choose_f_tile(F, K_pad)
    assert f_pad_check == F_pad, "w_p was not produced by prepare_classifier_params"
    w_resident = tf == F_pad
    tb, B_pad = _choose_batch_tiles(B, tf, K_pad, w_resident)
    n_b = B_pad // tb
    n_k = F_pad // tf

    # Per-call input prep: flatten (== torch.flatten(x, 1)), bf16 MXU dtype, pad.
    x_flat = x_nchw.reshape(B, F).astype(jnp.bfloat16)
    x_flat = jnp.pad(x_flat, ((0, B_pad - B), (0, F_pad - F)))

    if n_k == 1:
        kernel = _fused_kernel
        grid = (n_b,)
        in_specs = [
            pl.BlockSpec((tb, F_pad), lambda i: (i, 0)),        # x tile
            pl.BlockSpec((F_pad, K_pad), lambda i: (0, 0)),     # W (resident)
            pl.BlockSpec((1, K_pad), lambda i: (0, 0)),         # bias (resident)
        ]
        out_specs = pl.BlockSpec((tb, K_pad), lambda i: (i, 0))
        dim_sem = ("parallel",)
        w_bytes = F_pad * K_pad * 2                             # read once
    else:
        kernel = _tiled_kernel
        grid = (n_b, n_k)
        in_specs = [
            pl.BlockSpec((tb, tf), lambda i, k: (i, k)),        # x tile
            pl.BlockSpec((tf, K_pad), lambda i, k: (k, 0)),     # W tile (streamed)
            pl.BlockSpec((1, K_pad), lambda i, k: (0, 0)),      # bias (resident)
        ]
        out_specs = pl.BlockSpec((tb, K_pad), lambda i, k: (i, 0))
        dim_sem = ("parallel", "arbitrary")
        w_bytes = n_b * F_pad * K_pad * 2                       # re-streamed per batch tile

    cost = pl.CostEstimate(
        flops=2 * B_pad * F_pad * K_pad,
        transcendentals=B_pad * K_pad,
        bytes_accessed=(B_pad * F_pad * 2) + w_bytes + (K_pad * 4)
        + (B_pad * K_pad * 4),
    )

    out = pl.pallas_call(
        kernel,
        out_shape=jax.ShapeDtypeStruct((B_pad, K_pad), jnp.float32),
        grid_spec=pltpu.PrefetchScalarGridSpec(
            num_scalar_prefetch=0,
            grid=grid,
            in_specs=in_specs,
            out_specs=out_specs,
        ),
        compiler_params=pltpu.CompilerParams(
            dimension_semantics=dim_sem,
            vmem_limit_bytes=_VMEM_LIMIT,
        ),
        cost_estimate=cost,
    )(x_flat, w_p, b_p)

    return out[:B, :num_classes]


if __name__ == "__main__":
    # Small deterministic shapes consistent with an NCHW image classifier.
    # TODO(synk): `pretrained_model` is a black box in the spec; stood in by a
    # deterministic linear head (flatten -> logits) fused with the Softmax(dim=1).
    B, C, H, W = 2, 4, 16, 16
    K = 128  # number of classes (lane-dense)
    F = C * H * W

    key = jax.random.PRNGKey(0)
    kx, kw, kb = jax.random.split(key, 3)
    x = jax.random.normal(kx, (B, C, H, W), dtype=jnp.float32)
    w = jax.random.normal(kw, (F, K), dtype=jnp.float32) * 0.02
    b = jax.random.normal(kb, (K,), dtype=jnp.float32) * 0.01

    # Static-weight prep hoisted out of the per-call path (done once).
    w_p, b_p = prepare_classifier_params(w, b)

    probs = classifier_forward(x, w_p, b_p, num_classes=K)
    probs = jax.block_until_ready(probs)

    # Reference: same bf16 matmul inputs, f32 accumulation + f32 softmax.
    x_flat = x.reshape(B, F).astype(jnp.bfloat16)
    logits_ref = jnp.dot(
        x_flat, w.astype(jnp.bfloat16), preferred_element_type=jnp.float32
    ) + b
    ref = jax.nn.softmax(logits_ref, axis=1)

    assert probs.shape == (B, K)
    row_sums = jnp.sum(probs, axis=1)
    assert bool(jnp.all(jnp.abs(row_sums - 1.0) < 1e-4)), row_sums
    assert bool(jnp.max(jnp.abs(probs - ref)) < 1e-3)

    print("KERNEL_OK")
</pallas_src>

<mosaic_0001>
module attributes {stable_mosaic.version = 11 : i64} {
  func.func @_fused_kernel(%arg0: i32, %arg1: memref<8x1024xbf16, #tpu.memory_space<vmem>>, %arg2: memref<1024x128xbf16, #tpu.memory_space<vmem>>, %arg3: memref<1x128xf32, #tpu.memory_space<vmem>>, %arg4: memref<8x128xf32, #tpu.memory_space<vmem>>) attributes {dimension_semantics = [#tpu.dimension_semantics<parallel>], iteration_bounds = array<i64: 1>, scalar_prefetch = 0 : i64, scratch_operands = 0 : i64, tpu.core_type = #tpu.core_type<tc>, window_params = [{transform_indices = @transform_0, window_bounds = array<i64: 8, 1024>}, {pipeline_mode = #tpu.pipeline_mode<synchronous>, transform_indices = @transform_1, window_bounds = array<i64: 1024, 128>}, {pipeline_mode = #tpu.pipeline_mode<synchronous>, transform_indices = @transform_2, window_bounds = array<i64: 1, 128>}, {transform_indices = @transform_3, window_bounds = array<i64: 8, 128>}]} {
    %c0 = arith.constant 0 : index
    %c0_0 = arith.constant 0 : index
    %0 = vector.load %arg1[%c0, %c0_0] : memref<8x1024xbf16, #tpu.memory_space<vmem>>, vector<8x1024xbf16>
    %c0_1 = arith.constant 0 : index
    %c0_2 = arith.constant 0 : index
    %1 = vector.load %arg2[%c0_1, %c0_2] : memref<1024x128xbf16, #tpu.memory_space<vmem>>, vector<1024x128xbf16>
    %cst = arith.constant dense<0.000000e+00> : vector<8x128xf32>
    %2 = tpu.matmul %0, %1, %cst {dimension_numbers = #tpu.dot_dimension_numbers<[1], [0], [0], [1], [0, 0, 1, 1], [], []>} : vector<8x1024xbf16>, vector<1024x128xbf16>, vector<8x128xf32> -> vector<8x128xf32>
    %c0_3 = arith.constant 0 : index
    %c0_4 = arith.constant 0 : index
    %3 = vector.load %arg3[%c0_3, %c0_4] : memref<1x128xf32, #tpu.memory_space<vmem>>, vector<1x128xf32>
    %4 = vector.broadcast %3 : vector<1x128xf32> to vector<8x128xf32>
    %5 = arith.addf %2, %4 : vector<8x128xf32>
    %cst_5 = arith.constant dense<0xFF800000> : vector<8xf32>
    %6 = vector.multi_reduction <maximumf>, %5, %cst_5 [1] : vector<8x128xf32> to vector<8xf32>
    %7 = vector.shape_cast %6 : vector<8xf32> to vector<8x1xf32>
    %8 = vector.broadcast %7 : vector<8x1xf32> to vector<8x128xf32>
    %9 = arith.subf %5, %8 : vector<8x128xf32>
    %10 = math.exp %9 : vector<8x128xf32>
    %cst_6 = arith.constant dense<0.000000e+00> : vector<8xf32>
    %11 = vector.multi_reduction <add>, %10, %cst_6 [1] : vector<8x128xf32> to vector<8xf32>
    %12 = vector.shape_cast %11 : vector<8xf32> to vector<8x1xf32>
    %13 = vector.broadcast %12 : vector<8x1xf32> to vector<8x128xf32>
    %14 = arith.divf %10, %13 : vector<8x128xf32>
    %c0_7 = arith.constant 0 : index
    %c0_8 = arith.constant 0 : index
    %15 = vector.load %arg4[%c0_7, %c0_8] : memref<8x128xf32, #tpu.memory_space<vmem>>, vector<8x128xf32>
    tpu.vector_store %arg4[%c0_7, %c0_8], %14 {strides = array<i32>} : memref<8x128xf32, #tpu.memory_space<vmem>>, vector<8x128xf32>,
    return
  }
  func.func @transform_0(%arg0: i32) -> (i32, i32) {
    %c0_i32 = arith.constant 0 : i32
    %c0_i32_0 = arith.constant 0 : i32
    return %arg0, %c0_i32 : i32, i32
  }
  func.func @transform_1(%arg0: i32) -> (i32, i32) {
    %c0_i32 = arith.constant 0 : i32
    %c0_i32_0 = arith.constant 0 : i32
    %c0_i32_1 = arith.constant 0 : i32
    return %c0_i32, %c0_i32_0 : i32, i32
  }
  func.func @transform_2(%arg0: i32) -> (i32, i32) {
    %c0_i32 = arith.constant 0 : i32
    %c0_i32_0 = arith.constant 0 : i32
    %c0_i32_1 = arith.constant 0 : i32
    return %c0_i32, %c0_i32_0 : i32, i32
  }
  func.func @transform_3(%arg0: i32) -> (i32, i32) {
    %c0_i32 = arith.constant 0 : i32
    %c0_i32_0 = arith.constant 0 : i32
    return %arg0, %c0_i32 : i32, i32
  }
}

</mosaic_0001>

<llo_original>
// kernel: classifier_forward.1
$region0: #{classifier_forward.1}
  #allocation0 [shape = 'u32[]', space=smem, size = 0x4, offset = 0x4, fixed_abs, tag = 'smem constant byte address 0x4 - core index']
  #allocation1 [shape = 'u32[144,128]{1,0:T(1,128)}', space=vmem, size = 0x12000, scoped, tag = 'internal scratch']
  %s0 = inlined_call_operand.vmem [shape: bf16[8,1024], index: 0, kind: input, shape index: {}]
  %s1 = inlined_call_operand.hbm [shape: bf16[1024,128], index: 1, kind: input, shape index: {}]
  %s2 = inlined_call_operand.vmem [shape: f32[1,128], index: 2, kind: input, shape index: {}]
  %s3 = inlined_call_operand.vmem [shape: f32[8,128], index: 3, kind: output, shape index: {}]
  %s4 = sld [smem:[#allocation0]]
  $region26: #{classifier_forward.1} parent=0
    _
  %s6 = ssub.s32 1, %s4
  %s7 = scalar_select 0, %s6, %s4
  $region1: #{classifier_forward.1} parent=0
    #allocation2 [shape = 'u8[262144]{0}', space=vmem, size = 0x40000, scoped, tag = 'input window, operand 1, single buffered']
    #allocation3 [shape = 's32[1]{0}', space=sflag, size = 0x4, scoped, tag = 'scoped memory for classifier_forward.1']
    %8 = vsyncpa [#allocation3], 0
    // Predicated region
    $region2: #{classifier_forward.1} parent=1 // pred_check
      _
    $region3: #{classifier_forward.1} parent=1 // pred_check_branch
      %10 = sbr.rel (0) target = $region5
    $region4: #{classifier_forward.1} parent=1 // pred_region
      _
    $region5: #{classifier_forward.1} parent=1 // pred_fallthru
      _
    // Predicated region
    $region6: #{classifier_forward.1} parent=1 // pred_check
      _
    $region7: #{classifier_forward.1} parent=1 // pred_check_branch
      %12 = sbr.rel (0) target = $region9
    $region8: #{classifier_forward.1} parent=1 // pred_region
      %s14 = ssub.s32 8192, 8192
      %15 = vsyncadd [#allocation3], %s14
      %s16 = sshll.u32 [#allocation2], 4
      %s17 = int_to_ptr.vmem [resolvable:$true] %s16
      %22 = dma.hbm_to_vmem [thread:$0]  %s1, 8192, %s17, [#allocation3], 64, 64, 4
    $region9: #{classifier_forward.1} parent=1 // pred_fallthru
      _
    // Predicated region
    $region10: #{classifier_forward.1} parent=1 // pred_check
      _
    $region11: #{classifier_forward.1} parent=1 // pred_check_branch
      %24 = sbr.rel (0) target = $region13
    $region12: #{classifier_forward.1} parent=1 // pred_region
      _
    $region13: #{classifier_forward.1} parent=1 // pred_fallthru
      _
    // Predicated region
    $region14: #{classifier_forward.1} parent=1 // pred_check
      _
    $region15: #{classifier_forward.1} parent=1 // pred_check_branch
      %26 = sbr.rel (0) target = $region17
    $region16: #{classifier_forward.1} parent=1 // pred_region
      %27 = dma.done [#allocation3], 8192
    $region17: #{classifier_forward.1} parent=1 // pred_fallthru
      _
    %v29 = vld [vmem:[%s0] sm:$0xff]
    %v30 = vld [vmem:[%s0 + $0x8] sm:$0xff]
    %v31 = vld [vmem:[%s0 + $0x10] sm:$0xff]
    %v32 = vld [vmem:[%s0 + $0x18] sm:$0xff]
    %v33 = vld [vmem:[#allocation2] sm:$0xf]
    %v34 = vld [vmem:[#allocation2 + $0x4] sm:$0xf]
    %v35 = vld [vmem:[#allocation2 + $0x8] sm:$0xf]
    %v36 = vld [vmem:[#allocation2 + $0xc] sm:$0xf]
    %v37 = vld [vmem:[#allocation2 + $0x10] sm:$0xf]
    %v38 = vld [vmem:[#allocation2 + $0x14] sm:$0xf]
    %v39 = vld [vmem:[#allocation2 + $0x18] sm:$0xf]
    %v40 = vld [vmem:[#allocation2 + $0x1c] sm:$0xf]
    %v41 = vld [vmem:[#allocation2 + $0x20] sm:$0xf]
    %v42 = vld [vmem:[#allocation2 + $0x24] sm:$0xf]
    %v43 = vld [vmem:[#allocation2 + $0x28] sm:$0xf]
    %v44 = vld [vmem:[#allocation2 + $0x2c] sm:$0xf]
    %v45 = vld [vmem:[#allocation2 + $0x30] sm:$0xf]
    %v46 = vld [vmem:[#allocation2 + $0x34] sm:$0xf]
    %v47 = vld [vmem:[#allocation2 + $0x38] sm:$0xf]
    %v48 = vld [vmem:[#allocation2 + $0x3c] sm:$0xf]
    %v49 = vld [vmem:[#allocation2 + $0x40] sm:$0xf]
    %v50 = vld [vmem:[#allocation2 + $0x44] sm:$0xf]
    %v51 = vld [vmem:[#allocation2 + $0x48] sm:$0xf]
    %v52 = vld [vmem:[#allocation2 + $0x4c] sm:$0xf]
    %v53 = vld [vmem:[#allocation2 + $0x50] sm:$0xf]
    %v54 = vld [vmem:[#allocation2 + $0x54] sm:$0xf]
    %v55 = vld [vmem:[#allocation2 + $0x58] sm:$0xf]
    %v56 = vld [vmem:[#allocation2 + $0x5c] sm:$0xf]
    %v57 = vld [vmem:[#allocation2 + $0x60] sm:$0xf]
    %v58 = vld [vmem:[#allocation2 + $0x64] sm:$0xf]
    %v59 = vld [vmem:[#allocation2 + $0x68] sm:$0xf]
    %v60 = vld [vmem:[#allocation2 + $0x6c] sm:$0xf]
    %v61 = vld [vmem:[#allocation2 + $0x70] sm:$0xf]
    %v62 = vld [vmem:[#allocation2 + $0x74] sm:$0xf]
    %v63 = vld [vmem:[#allocation2 + $0x78] sm:$0xf]
    %v64 = vld [vmem:[#allocation2 + $0x7c] sm:$0xf]
    %v65 = vld [vmem:[#allocation2 + $0x80] sm:$0xf]
    %v66 = vld [vmem:[#allocation2 + $0x84] sm:$0xf]
    %v67 = vld [vmem:[#allocation2 + $0x88] sm:$0xf]
    %v68 = vld [vmem:[#allocation2 + $0x8c] sm:$0xf]
    %v69 = vld [vmem:[#allocation2 + $0x90] sm:$0xf]
    %v70 = vld [vmem:[#allocation2 + $0x94] sm:$0xf]
    %v71 = vld [vmem:[#allocation2 + $0x98] sm:$0xf]
    %v72 = vld [vmem:[#allocation2 + $0x9c] sm:$0xf]
    %v73 = vld [vmem:[#allocation2 + $0xa0] sm:$0xf]
    %v74 = vld [vmem:[#allocation2 + $0xa4] sm:$0xf]
    %v75 = vld [vmem:[#allocation2 + $0xa8] sm:$0xf]
    %v76 = vld [vmem:[#allocation2 + $0xac] sm:$0xf]
    %v77 = vld [vmem:[#allocation2 + $0xb0] sm:$0xf]
    %v78 = vld [vmem:[#allocation2 + $0xb4] sm:$0xf]
    %v79 = vld [vmem:[#allocation2 + $0xb8] sm:$0xf]
    %v80 = vld [vmem:[#allocation2 + $0xbc] sm:$0xf]
    %v81 = vld [vmem:[#allocation2 + $0xc0] sm:$0xf]
    %v82 = vld [vmem:[#allocation2 + $0xc4] sm:$0xf]
    %v83 = vld [vmem:[#allocation2 + $0xc8] sm:$0xf]
    %v84 = vld [vmem:[#allocation2 + $0xcc] sm:$0xf]
    %v85 = vld [vmem:[#allocation2 + $0xd0] sm:$0xf]
    %v86 = vld [vmem:[#allocation2 + $0xd4] sm:$0xf]
    %v87 = vld [vmem:[#allocation2 + $0xd8] sm:$0xf]
    %v88 = vld [vmem:[#allocation2 + $0xdc] sm:$0xf]
    %v89 = vld [vmem:[#allocation2 + $0xe0] sm:$0xf]
    %v90 = vld [vmem:[#allocation2 + $0xe4] sm:$0xf]
    %v91 = vld [vmem:[#allocation2 + $0xe8] sm:$0xf]
    %v92 = vld [vmem:[#allocation2 + $0xec] sm:$0xf]
    %v93 = vld [vmem:[#allocation2 + $0xf0] sm:$0xf]
    %v94 = vld [vmem:[#allocation2 + $0xf4] sm:$0xf]
    %v95 = vld [vmem:[#allocation2 + $0xf8] sm:$0xf]
    %v96 = vld [vmem:[#allocation2 + $0xfc] sm:$0xf]
    %v97 = vld [vmem:[#allocation2 + $0x100] sm:$0xf]
    %v98 = vld [vmem:[#allocation2 + $0x104] sm:$0xf]
    %v99 = vld [vmem:[#allocation2 + $0x108] sm:$0xf]
    %v100 = vld [vmem:[#allocation2 + $0x10c] sm:$0xf]
    %v101 = vld [vmem:[#allocation2 + $0x110] sm:$0xf]
    %v102 = vld [vmem:[#allocation2 + $0x114] sm:$0xf]
    %v103 = vld [vmem:[#allocation2 + $0x118] sm:$0xf]
    %v104 = vld [vmem:[#allocation2 + $0x11c] sm:$0xf]
    %v105 = vld [vmem:[#allocation2 + $0x120] sm:$0xf]
    %v106 = vld [vmem:[#allocation2 + $0x124] sm:$0xf]
    %v107 = vld [vmem:[#allocation2 + $0x128] sm:$0xf]
    %v108 = vld [vmem:[#allocation2 + $0x12c] sm:$0xf]
    %v109 = vld [vmem:[#allocation2 + $0x130] sm:$0xf]
    %v110 = vld [vmem:[#allocation2 + $0x134] sm:$0xf]
    %v111 = vld [vmem:[#allocation2 + $0x138] sm:$0xf]
    %v112 = vld [vmem:[#allocation2 + $0x13c] sm:$0xf]
    %v113 = vld [vmem:[#allocation2 + $0x140] sm:$0xf]
    %v114 = vld [vmem:[#allocation2 + $0x144] sm:$0xf]
    %v115 = vld [vmem:[#allocation2 + $0x148] sm:$0xf]
    %v116 = vld [vmem:[#allocation2 + $0x14c] sm:$0xf]
    %v117 = vld [vmem:[#allocation2 + $0x150] sm:$0xf]
    %v118 = vld [vmem:[#allocation2 + $0x154] sm:$0xf]
    %v119 = vld [vmem:[#allocation2 + $0x158] sm:$0xf]
    %v120 = vld [vmem:[#allocation2 + $0x15c] sm:$0xf]
    %v121 = vld [vmem:[#allocation2 + $0x160] sm:$0xf]
    %v122 = vld [vmem:[#allocation2 + $0x164] sm:$0xf]
    %v123 = vld [vmem:[#allocation2 + $0x168] sm:$0xf]
    %v124 = vld [vmem:[#allocation2 + $0x16c] sm:$0xf]
    %v125 = vld [vmem:[#allocation2 + $0x170] sm:$0xf]
    %v126 = vld [vmem:[#allocation2 + $0x174] sm:$0xf]
    %v127 = vld [vmem:[#allocation2 + $0x178] sm:$0xf]
    %v128 = vld [vmem:[#allocation2 + $0x17c] sm:$0xf]
    %v129 = vld [vmem:[#allocation2 + $0x180] sm:$0xf]
    %v130 = vld [vmem:[#allocation2 + $0x184] sm:$0xf]
    %v131 = vld [vmem:[#allocation2 + $0x188] sm:$0xf]
    %v132 = vld [vmem:[#allocation2 + $0x18c] sm:$0xf]
    %v133 = vld [vmem:[#allocation2 + $0x190] sm:$0xf]
    %v134 = vld [vmem:[#allocation2 + $0x194] sm:$0xf]
    %v135 = vld [vmem:[#allocation2 + $0x198] sm:$0xf]
    %v136 = vld [vmem:[#allocation2 + $0x19c] sm:$0xf]
    %v137 = vld [vmem:[#allocation2 + $0x1a0] sm:$0xf]
    %v138 = vld [vmem:[#allocation2 + $0x1a4] sm:$0xf]
    %v139 = vld [vmem:[#allocation2 + $0x1a8] sm:$0xf]
    %v140 = vld [vmem:[#allocation2 + $0x1ac] sm:$0xf]
    %v141 = vld [vmem:[#allocation2 + $0x1b0] sm:$0xf]
    %v142 = vld [vmem:[#allocation2 + $0x1b4] sm:$0xf]
    %v143 = vld [vmem:[#allocation2 + $0x1b8] sm:$0xf]
    %v144 = vld [vmem:[#allocation2 + $0x1bc] sm:$0xf]
    %v145 = vld [vmem:[#allocation2 + $0x1c0] sm:$0xf]
    %v146 = vld [vmem:[#allocation2 + $0x1c4] sm:$0xf]
    %v147 = vld [vmem:[#allocation2 + $0x1c8] sm:$0xf]
    %v148 = vld [vmem:[#allocation2 + $0x1cc] sm:$0xf]
    %v149 = vld [vmem:[#allocation2 + $0x1d0] sm:$0xf]
    %v150 = vld [vmem:[#allocation2 + $0x1d4] sm:$0xf]
    %v151 = vld [vmem:[#allocation2 + $0x1d8] sm:$0xf]
    %v152 = vld [vmem:[#allocation2 + $0x1dc] sm:$0xf]
    %v153 = vld [vmem:[#allocation2 + $0x1e0] sm:$0xf]
    %v154 = vld [vmem:[#allocation2 + $0x1e4] sm:$0xf]
    %v155 = vld [vmem:[#allocation2 + $0x1e8] sm:$0xf]
    %v156 = vld [vmem:[#allocation2 + $0x1ec] sm:$0xf]
    %v157 = vld [vmem:[#allocation2 + $0x1f0] sm:$0xf]
    %v158 = vld [vmem:[#allocation2 + $0x1f4] sm:$0xf]
    %v159 = vld [vmem:[#allocation2 + $0x1f8] sm:$0xf]
    %v160 = vld [vmem:[#allocation2 + $0x1fc] sm:$0xf]
    %v161 = vld [vmem:[%s2] sm:$0x1]
    %v163 = vlaneseq
    %v164 = vshrl.u32 %v163, 7
    %v165 = vsub.s32 0, %v164
    %v166 = vrot.slane %v161, %v165
    %v172 = vunpack.c.l.b16 %v29
    %v173 = vunpack.c.h.b16 %v29
    %v174 = vunpack.c.l.b16 %v30
    %v175 = vunpack.c.h.b16 %v30
    %v176 = vunpack.c.l.b16 %v31
    %v177 = vunpack.c.h.b16 %v31
    %v178 = vunpack.c.l.b16 %v32
    %v179 = vunpack.c.h.b16 %v32
    %v180 = vpack.c.b16 %v172, %v172
    %v181 = vpack.c.b16 %v173, %v173
    %v182 = vpack.c.b16 %v174, %v174
    %v183 = vpack.c.b16 %v175, %v175
    %v184 = vpack.c.b16 %v176, %v176
    %v185 = vpack.c.b16 %v177, %v177
    %v186 = vpack.c.b16 %v178, %v178
    %v187 = vpack.c.b16 %v179, %v179
    %v324 = vunpack.c.l.b16 %v33
    %v325 = vunpack.c.l.b16 %v34
    %v326 = vunpack.c.l.b16 %v35
    %v327 = vunpack.c.l.b16 %v36
    %v328 = vunpack.c.l.b16 %v37
    %v329 = vunpack.c.l.b16 %v38
    %v330 = vunpack.c.l.b16 %v39
    %v331 = vunpack.c.l.b16 %v40
    %v332 = vunpack.c.l.b16 %v41
    %v333 = vunpack.c.l.b16 %v42
    %v334 = vunpack.c.l.b16 %v43
    %v335 = vunpack.c.l.b16 %v44
    %v336 = vunpack.c.l.b16 %v45
    %v337 = vunpack.c.l.b16 %v46
    %v338 = vunpack.c.l.b16 %v47
    %v339 = vunpack.c.l.b16 %v48
    %v340 = vunpack.c.l.b16 %v49
    %v341 = vunpack.c.l.b16 %v50
    %v342 = vunpack.c.l.b16 %v51
    %v343 = vunpack.c.l.b16 %v52
    %v344 = vunpack.c.l.b16 %v53
    %v345 = vunpack.c.l.b16 %v54
    %v346 = vunpack.c.l.b16 %v55
    %v347 = vunpack.c.l.b16 %v56
    %v348 = vunpack.c.l.b16 %v57
    %v349 = vunpack.c.l.b16 %v58
    %v350 = vunpack.c.l.b16 %v59
    %v351 = vunpack.c.l.b16 %v60
    %v352 = vunpack.c.l.b16 %v61
    %v353 = vunpack.c.l.b16 %v62
    %v354 = vunpack.c.l.b16 %v63
    %v355 = vunpack.c.l.b16 %v64
    %v356 = vunpack.c.l.b16 %v65
    %v357 = vunpack.c.l.b16 %v66
    %v358 = vunpack.c.l.b16 %v67
    %v359 = vunpack.c.l.b16 %v68
    %v360 = vunpack.c.l.b16 %v69
    %v361 = vunpack.c.l.b16 %v70
    %v362 = vunpack.c.l.b16 %v71
    %v363 = vunpack.c.l.b16 %v72
    %v364 = vunpack.c.l.b16 %v73
    %v365 = vunpack.c.l.b16 %v74
    %v366 = vunpack.c.l.b16 %v75
    %v367 = vunpack.c.l.b16 %v76
    %v368 = vunpack.c.l.b16 %v77
    %v369 = vunpack.c.l.b16 %v78
    %v370 = vunpack.c.l.b16 %v79
    %v371 = vunpack.c.l.b16 %v80
    %v372 = vunpack.c.l.b16 %v81
    %v373 = vunpack.c.l.b16 %v82
    %v374 = vunpack.c.l.b16 %v83
    %v375 = vunpack.c.l.b16 %v84
    %v376 = vunpack.c.l.b16 %v85
    %v377 = vunpack.c.l.b16 %v86
    %v378 = vunpack.c.l.b16 %v87
    %v379 = vunpack.c.l.b16 %v88
    %v380 = vunpack.c.l.b16 %v89
    %v381 = vunpack.c.l.b16 %v90
    %v382 = vunpack.c.l.b16 %v91
    %v383 = vunpack.c.l.b16 %v92
    %v384 = vunpack.c.l.b16 %v93
    %v385 = vunpack.c.l.b16 %v94
    %v386 = vunpack.c.l.b16 %v95
    %v387 = vunpack.c.l.b16 %v96
    %v388 = vunpack.c.l.b16 %v97
    %v389 = vunpack.c.l.b16 %v98
    %v390 = vunpack.c.l.b16 %v99
    %v391 = vunpack.c.l.b16 %v100
    %v392 = vunpack.c.l.b16 %v101
    %v393 = vunpack.c.l.b16 %v102
    %v394 = vunpack.c.l.b16 %v103
    %v395 = vunpack.c.l.b16 %v104
    %v396 = vunpack.c.l.b16 %v105
    %v397 = vunpack.c.l.b16 %v106
    %v398 = vunpack.c.l.b16 %v107
    %v399 = vunpack.c.l.b16 %v108
    %v400 = vunpack.c.l.b16 %v109
    %v401 = vunpack.c.l.b16 %v110
    %v402 = vunpack.c.l.b16 %v111
    %v403 = vunpack.c.l.b16 %v112
    %v404 = vunpack.c.l.b16 %v113
    %v405 = vunpack.c.l.b16 %v114
    %v406 = vunpack.c.l.b16 %v115
    %v407 = vunpack.c.l.b16 %v116
    %v408 = vunpack.c.l.b16 %v117
    %v409 = vunpack.c.l.b16 %v118
    %v410 = vunpack.c.l.b16 %v119
    %v411 = vunpack.c.l.b16 %v120
    %v412 = vunpack.c.l.b16 %v121
    %v413 = vunpack.c.l.b16 %v122
    %v414 = vunpack.c.l.b16 %v123
    %v415 = vunpack.c.l.b16 %v124
    %v416 = vunpack.c.l.b16 %v125
    %v417 = vunpack.c.l.b16 %v126
    %v418 = vunpack.c.l.b16 %v127
    %v419 = vunpack.c.l.b16 %v128
    %v420 = vunpack.c.l.b16 %v129
    %v421 = vunpack.c.l.b16 %v130
    %v422 = vunpack.c.l.b16 %v131
    %v423 = vunpack.c.l.b16 %v132
    %v424 = vunpack.c.l.b16 %v133
    %v425 = vunpack.c.l.b16 %v134
    %v426 = vunpack.c.l.b16 %v135
    %v427 = vunpack.c.l.b16 %v136
    %v428 = vunpack.c.l.b16 %v137
    %v429 = vunpack.c.l.b16 %v138
    %v430 = vunpack.c.l.b16 %v139
    %v431 = vunpack.c.l.b16 %v140
    %v432 = vunpack.c.l.b16 %v141
    %v433 = vunpack.c.l.b16 %v142
    %v434 = vunpack.c.l.b16 %v143
    %v435 = vunpack.c.l.b16 %v144
    %v436 = vunpack.c.l.b16 %v145
    %v437 = vunpack.c.l.b16 %v146
    %v438 = vunpack.c.l.b16 %v147
    %v439 = vunpack.c.l.b16 %v148
    %v440 = vunpack.c.l.b16 %v149
    %v441 = vunpack.c.l.b16 %v150
    %v442 = vunpack.c.l.b16 %v151
    %v443 = vunpack.c.l.b16 %v152
    %v444 = vunpack.c.l.b16 %v153
    %v445 = vunpack.c.l.b16 %v154
    %v446 = vunpack.c.l.b16 %v155
    %v447 = vunpack.c.l.b16 %v156
    %v448 = vunpack.c.l.b16 %v157
    %v449 = vunpack.c.l.b16 %v158
    %v450 = vunpack.c.l.b16 %v159
    %v451 = vunpack.c.l.b16 %v160
    %v452 = vpack.c.b16 %v325, %v324
    %v453 = vpack.c.b16 %v327, %v326
    %v454 = vpack.c.b16 %v329, %v328
    %v455 = vpack.c.b16 %v331, %v330
    %v456 = vpack.c.b16 %v333, %v332
    %v457 = vpack.c.b16 %v335, %v334
    %v458 = vpack.c.b16 %v337, %v336
    %v459 = vpack.c.b16 %v339, %v338
    %v460 = vpack.c.b16 %v341, %v340
    %v461 = vpack.c.b16 %v343, %v342
    %v462 = vpack.c.b16 %v345, %v344
    %v463 = vpack.c.b16 %v347, %v346
    %v464 = vpack.c.b16 %v349, %v348
    %v465 = vpack.c.b16 %v351, %v350
    %v466 = vpack.c.b16 %v353, %v352
    %v467 = vpack.c.b16 %v355, %v354
    %v468 = vpack.c.b16 %v357, %v356
    %v469 = vpack.c.b16 %v359, %v358
    %v470 = vpack.c.b16 %v361, %v360
    %v471 = vpack.c.b16 %v363, %v362
    %v472 = vpack.c.b16 %v365, %v364
    %v473 = vpack.c.b16 %v367, %v366
    %v474 = vpack.c.b16 %v369, %v368
    %v475 = vpack.c.b16 %v371, %v370
    %v476 = vpack.c.b16 %v373, %v372
    %v477 = vpack.c.b16 %v375, %v374
    %v478 = vpack.c.b16 %v377, %v376
    %v479 = vpack.c.b16 %v379, %v378
    %v480 = vpack.c.b16 %v381, %v380
    %v481 = vpack.c.b16 %v383, %v382
    %v482 = vpack.c.b16 %v385, %v384
    %v483 = vpack.c.b16 %v387, %v386
    %v484 = vpack.c.b16 %v389, %v388
    %v485 = vpack.c.b16 %v391, %v390
    %v486 = vpack.c.b16 %v393, %v392
    %v487 = vpack.c.b16 %v395, %v394
    %v488 = vpack.c.b16 %v397, %v396
    %v489 = vpack.c.b16 %v399, %v398
    %v490 = vpack.c.b16 %v401, %v400
    %v491 = vpack.c.b16 %v403, %v402
    %v492 = vpack.c.b16 %v405, %v404
    %v493 = vpack.c.b16 %v407, %v406
    %v494 = vpack.c.b16 %v409, %v408
    %v495 = vpack.c.b16 %v411, %v410
    %v496 = vpack.c.b16 %v413, %v412
    %v497 = vpack.c.b16 %v415, %v414
    %v498 = vpack.c.b16 %v417, %v416
    %v499 = vpack.c.b16 %v419, %v418
    %v500 = vpack.c.b16 %v421, %v420
    %v501 = vpack.c.b16 %v423, %v422
    %v502 = vpack.c.b16 %v425, %v424
    %v503 = vpack.c.b16 %v427, %v426
    %v504 = vpack.c.b16 %v429, %v428
    %v505 = vpack.c.b16 %v431, %v430
    %v506 = vpack.c.b16 %v433, %v432
    %v507 = vpack.c.b16 %v435, %v434
    %v508 = vpack.c.b16 %v437, %v436
    %v509 = vpack.c.b16 %v439, %v438
    %v510 = vpack.c.b16 %v441, %v440
    %v511 = vpack.c.b16 %v443, %v442
    %v512 = vpack.c.b16 %v445, %v444
    %v513 = vpack.c.b16 %v447, %v446
    %v514 = vpack.c.b16 %v449, %v448
    %v515 = vpack.c.b16 %v451, %v450
    %580 = vmatprep.subr.bf16.mxu0 0
    %581 = vmatpush1.bf16.msra.mxu0 %v452
    %582 = vmatprep.subr.bf16.mxu0 0
    %583 = vmatpush1.bf16.msra.mxu0 %v453
    %584 = vmatprep.subr.bf16.mxu0 0
    %585 = vmatpush1.bf16.msra.mxu0 %v454
    %586 = vmatprep.subr.bf16.mxu0 0
    %587 = vmatpush1.bf16.msra.mxu0 %v455
    %588 = vmatprep.subr.bf16.mxu0 0
    %589 = vmatpush1.bf16.msra.mxu0 %v456
    %590 = vmatprep.subr.bf16.mxu0 0
    %591 = vmatpush1.bf16.msra.mxu0 %v457
    %592 = vmatprep.subr.bf16.mxu0 0
    %593 = vmatpush1.bf16.msra.mxu0 %v458
    %594 = vmatprep.subr.bf16.mxu0 0
    %595 = vmatpush1.bf16.msra.mxu0 %v459
    %596 = vmatprep.subr.bf16.mxu0 0
    %597 = vmatpush1.bf16.msra.mxu0 %v460
    %598 = vmatprep.subr.bf16.mxu0 0
    %599 = vmatpush1.bf16.msra.mxu0 %v461
    %600 = vmatprep.subr.bf16.mxu0 0
    %601 = vmatpush1.bf16.msra.mxu0 %v462
    %602 = vmatprep.subr.bf16.mxu0 0
    %603 = vmatpush1.bf16.msra.mxu0 %v463
    %604 = vmatprep.subr.bf16.mxu0 0
    %605 = vmatpush1.bf16.msra.mxu0 %v464
    %606 = vmatprep.subr.bf16.mxu0 0
    %607 = vmatpush1.bf16.msra.mxu0 %v465
    %608 = vmatprep.subr.bf16.mxu0 0
    %609 = vmatpush1.bf16.msra.mxu0 %v466
    %610 = vmatprep.subr.bf16.mxu0 0
    %611 = vmatpush1.bf16.msra.mxu0 %v467
    %612 = vmatprep.mubr.bf16.mxu0 %v181
    %613 = vmatmul.mubr.bf16.gmra.mrb[0].mxu0 %v180
    %v614 = vpop.f32.mrb[0].mxu0
    %v615 = vadd.f32 %v166, %v614
    %v616 = vpop.f32.mrb[0].mxu0
    %v617 = vpop.f32.mrb[0].mxu0
    %v618 = vpop.f32.mrb[0].mxu0
    %619 = vdwg.mxu0
    %620 = vmatprep.subr.bf16.mxu0 0
    %621 = vmatpush1.bf16.msra.mxu0 %v468
    %622 = vmatprep.subr.bf16.mxu0 0
    %623 = vmatpush1.bf16.msra.mxu0 %v469
    %624 = vmatprep.subr.bf16.mxu0 0
    %625 = vmatpush1.bf16.msra.mxu0 %v470
    %626 = vmatprep.subr.bf16.mxu0 0
    %627 = vmatpush1.bf16.msra.mxu0 %v471
    %628 = vmatprep.subr.bf16.mxu0 0
    %629 = vmatpush1.bf16.msra.mxu0 %v472
    %630 = vmatprep.subr.bf16.mxu0 0
    %631 = vmatpush1.bf16.msra.mxu0 %v473
    %632 = vmatprep.subr.bf16.mxu0 0
    %633 = vmatpush1.bf16.msra.mxu0 %v474
    %634 = vmatprep.subr.bf16.mxu0 0
    %635 = vmatpush1.bf16.msra.mxu0 %v475
    %636 = vmatprep.subr.bf16.mxu0 0
    %637 = vmatpush1.bf16.msra.mxu0 %v476
    %638 = vmatprep.subr.bf16.mxu0 0
    %639 = vmatpush1.bf16.msra.mxu0 %v477
    %640 = vmatprep.subr.bf16.mxu0 0
    %641 = vmatpush1.bf16.msra.mxu0 %v478
    %642 = vmatprep.subr.bf16.mxu0 0
    %643 = vmatpush1.bf16.msra.mxu0 %v479
    %644 = vmatprep.subr.bf16.mxu0 0
    %645 = vmatpush1.bf16.msra.mxu0 %v480
    %646 = vmatprep.subr.bf16.mxu0 0
    %647 = vmatpush1.bf16.msra.mxu0 %v481
    %648 = vmatprep.subr.bf16.mxu0 0
    %649 = vmatpush1.bf16.msra.mxu0 %v482
    %650 = vmatprep.subr.bf16.mxu0 0
    %651 = vmatpush1.bf16.msra.mxu0 %v483
    %652 = vmatprep.mubr.bf16.mxu0 %v183
    %653 = vmatmul.mubr.bf16.gmra.mrb[0].mxu0 %v182
    %v654 = vpop.f32.mrb[0].mxu0
    %v655 = vadd.f32 %v615, %v654
    %v656 = vpop.f32.mrb[0].mxu0
    %v657 = vpop.f32.mrb[0].mxu0
    %v658 = vpop.f32.mrb[0].mxu0
    %659 = vdwg.mxu0
    %660 = vmatprep.subr.bf16.mxu0 0
    %661 = vmatpush1.bf16.msra.mxu0 %v484
    %662 = vmatprep.subr.bf16.mxu0 0
    %663 = vmatpush1.bf16.msra.mxu0 %v485
    %664 = vmatprep.subr.bf16.mxu0 0
    %665 = vmatpush1.bf16.msra.mxu0 %v486
    %666 = vmatprep.subr.bf16.mxu0 0
    %667 = vmatpush1.bf16.msra.mxu0 %v487
    %668 = vmatprep.subr.bf16.mxu0 0
    %669 = vmatpush1.bf16.msra.mxu0 %v488
    %670 = vmatprep.subr.bf16.mxu0 0
    %671 = vmatpush1.bf16.msra.mxu0 %v489
    %672 = vmatprep.subr.bf16.mxu0 0
    %673 = vmatpush1.bf16.msra.mxu0 %v490
    %674 = vmatprep.subr.bf16.mxu0 0
    %675 = vmatpush1.bf16.msra.mxu0 %v491
    %676 = vmatprep.subr.bf16.mxu0 0
    %677 = vmatpush1.bf16.msra.mxu0 %v492
    %678 = vmatprep.subr.bf16.mxu0 0
    %679 = vmatpush1.bf16.msra.mxu0 %v493
    %680 = vmatprep.subr.bf16.mxu0 0
    %681 = vmatpush1.bf16.msra.mxu0 %v494
    %682 = vmatprep.subr.bf16.mxu0 0
    %683 = vmatpush1.bf16.msra.mxu0 %v495
    %684 = vmatprep.subr.bf16.mxu0 0
    %685 = vmatpush1.bf16.msra.mxu0 %v496
    %686 = vmatprep.subr.bf16.mxu0 0
    %687 = vmatpush1.bf16.msra.mxu0 %v497
    %688 = vmatprep.subr.bf16.mxu0 0
    %689 = vmatpush1.bf16.msra.mxu0 %v498
    %690 = vmatprep.subr.bf16.mxu0 0
    %691 = vmatpush1.bf16.msra.mxu0 %v499
    %692 = vmatprep.mubr.bf16.mxu0 %v185
    %693 = vmatmul.mubr.bf16.gmra.mrb[0].mxu0 %v184
    %v694 = vpop.f32.mrb[0].mxu0
    %v695 = vadd.f32 %v655, %v694
    %v696 = vpop.f32.mrb[0].mxu0
    %v697 = vpop.f32.mrb[0].mxu0
    %v698 = vpop.f32.mrb[0].mxu0
    %699 = vdwg.mxu0
    %700 = vmatprep.subr.bf16.mxu0 0
    %701 = vmatpush1.bf16.msra.mxu0 %v500
    %702 = vmatprep.subr.bf16.mxu0 0
    %703 = vmatpush1.bf16.msra.mxu0 %v501
    %704 = vmatprep.subr.bf16.mxu0 0
    %705 = vmatpush1.bf16.msra.mxu0 %v502
    %706 = vmatprep.subr.bf16.mxu0 0
    %707 = vmatpush1.bf16.msra.mxu0 %v503
    %708 = vmatprep.subr.bf16.mxu0 0
    %709 = vmatpush1.bf16.msra.mxu0 %v504
    %710 = vmatprep.subr.bf16.mxu0 0
    %711 = vmatpush1.bf16.msra.mxu0 %v505
    %712 = vmatprep.subr.bf16.mxu0 0
    %713 = vmatpush1.bf16.msra.mxu0 %v506
    %714 = vmatprep.subr.bf16.mxu0 0
    %715 = vmatpush1.bf16.msra.mxu0 %v507
    %716 = vmatprep.subr.bf16.mxu0 0
    %717 = vmatpush1.bf16.msra.mxu0 %v508
    %718 = vmatprep.subr.bf16.mxu0 0
    %719 = vmatpush1.bf16.msra.mxu0 %v509
    %720 = vmatprep.subr.bf16.mxu0 0
    %721 = vmatpush1.bf16.msra.mxu0 %v510
    %722 = vmatprep.subr.bf16.mxu0 0
    %723 = vmatpush1.bf16.msra.mxu0 %v511
    %724 = vmatprep.subr.bf16.mxu0 0
    %725 = vmatpush1.bf16.msra.mxu0 %v512
    %726 = vmatprep.subr.bf16.mxu0 0
    %727 = vmatpush1.bf16.msra.mxu0 %v513
    %728 = vmatprep.subr.bf16.mxu0 0
    %729 = vmatpush1.bf16.msra.mxu0 %v514
    %730 = vmatprep.subr.bf16.mxu0 0
    %731 = vmatpush1.bf16.msra.mxu0 %v515
    %732 = vmatprep.mubr.bf16.mxu0 %v187
    %733 = vmatmul.mubr.bf16.gmra.mrb[0].mxu0 %v186
    %v734 = vpop.f32.mrb[0].mxu0
    %v735 = vadd.f32 %v695, %v734
    %v736 = vpop.f32.mrb[0].mxu0
    %v737 = vpop.f32.mrb[0].mxu0
    %v738 = vpop.f32.mrb[0].mxu0
    %739 = vdwg.mxu0
    %740 = vmax.xlane.f32.xlu0 %v735
    %v741 = vpop.xlane.xlu0 %740
    %v742 = vsub.f32 %v735, %v741
    %v743 = vmul.f32 %v742, 1.442695
    %v744 = vpow.pop %v743
    %745 = vadd.xlane.f32.xlu0 %v744
    %v746 = vpop.xlane.xlu0 %745
    %v747 = vrcp.pop %v746
    %v748 = vmul.f32 %v744, %v747
    %749 = vst [vmem:[%s3] sm:$0xff] %v748
    // Predicated region
    $region18: #{classifier_forward.1} parent=1 // pred_check
      _
    $region19: #{classifier_forward.1} parent=1 // pred_check_branch
      %751 = sbr.rel (0) target = $region21
    $region20: #{classifier_forward.1} parent=1 // pred_region
      _
    $region21: #{classifier_forward.1} parent=1 // pred_fallthru
      _
    // Predicated region
    $region22: #{classifier_forward.1} parent=1 // pred_check
      _
    $region23: #{classifier_forward.1} parent=1 // pred_check_branch
      %753 = sbr.rel (0) target = $region25
    $region24: #{classifier_forward.1} parent=1 // pred_region
      _
    $region25: #{classifier_forward.1} parent=1 // pred_fallthru
      _
    %754 = vsyncpa [#allocation3], 1

</llo_original>
